<compile_context>
chip_gen: v6e
topology: v6e:2x2x1
jax: 0.10.0
libtpu: 0.0.40
codegen_flags: <defaults>
</compile_context>

<pallas_src>
import functools

import jax
import jax.numpy as jnp
from jax.experimental import pallas as pl
from jax.experimental.pallas import tpu as pltpu


def _round_up(x, m):
    return ((x + m - 1) // m) * m


def _cdiv(a, b):
    return -(-a // b)


def _pad2d(a, shape):
    """Zero-pad a 2-D array up to `shape` (top-left aligned)."""
    out = jnp.zeros(shape, a.dtype)
    return out.at[: a.shape[0], : a.shape[1]].set(a)


def _hubernet_mlp_kernel(x_ref, w1_ref, w2_ref, w3_ref, b12_ref, b3_ref, o_ref):
    """3-layer MLP (Linear->ReLU->Linear->ReLU->Linear) on one batch tile.

    x_ref  : (TB, in_dim)      f32   (cast to bf16 in-kernel for the MXU)
    w1_ref : (in_dim, HP)      bf16  (hidden padded to 128 lanes)
    w2_ref : (HP, HP)          bf16
    w3_ref : (HP, OP)          bf16  (OP = out_dim padded to 128 lanes)
    b12_ref: (2, HP)           f32   rows = [b1, b2]
    b3_ref : (1, out_dim)      f32
    o_ref  : (TB, out_dim)     f32   real-width output (no padded writeback)
    """
    x = x_ref[...].astype(jnp.bfloat16)            # VPU cast, hidden under DMA

    # Layer 1: Linear(in_dim, 64) + ReLU   (f32 accumulate, bf16 re-feed)
    h1 = jnp.dot(x, w1_ref[...], preferred_element_type=jnp.float32)
    h1 = jnp.maximum(h1 + b12_ref[0:1, :], 0.0).astype(jnp.bfloat16)

    # Layer 2: Linear(64, 64) + ReLU
    h2 = jnp.dot(h1, w2_ref[...], preferred_element_type=jnp.float32)
    h2 = jnp.maximum(h2 + b12_ref[1:2, :], 0.0).astype(jnp.bfloat16)

    # Layer 3: Linear(64, out_dim)  (no activation — raw action values)
    out = jnp.dot(h2, w3_ref[...], preferred_element_type=jnp.float32)
    od = o_ref.shape[-1]
    o_ref[...] = (out[:, :od] + b3_ref[...]).astype(o_ref.dtype)


def pack_hubernet_params(params):
    """One-time repack of parameters into kernel-ready layout.

    Call once; reuse the result across forward calls (keeps the per-call
    wrapper free of casts / pads / scatter ops).
    """
    in_dim, hidden = params["w1"].shape
    out_dim = params["w3"].shape[1]
    LANE = 128
    HP = _round_up(hidden, LANE)      # hidden padded to a full lane width
    OP = _round_up(out_dim, LANE)     # MXU-side padding only (never stored)

    # Zero padding is exact: padded hidden activations are ReLU(0 + 0) = 0 and
    # padded weight rows/cols are 0, so they never contribute.
    w1 = _pad2d(params["w1"], (in_dim, HP)).astype(jnp.bfloat16)
    w2 = _pad2d(params["w2"], (HP, HP)).astype(jnp.bfloat16)
    w3 = _pad2d(params["w3"], (HP, OP)).astype(jnp.bfloat16)

    b12 = jnp.zeros((2, HP), jnp.float32)
    b12 = b12.at[0, :hidden].set(params["b1"].astype(jnp.float32))
    b12 = b12.at[1, :hidden].set(params["b2"].astype(jnp.float32))
    b3 = params["b3"].astype(jnp.float32).reshape(1, out_dim)

    return {"w1": w1, "w2": w2, "w3": w3, "b12": b12, "b3": b3}


@functools.partial(jax.jit, static_argnames=("tb_max",))
def hubernet_forward(observation, packed, tb_max=4096):
    """HuberNet forward pass in a single fused Pallas kernel.

    observation: (B, INPUT_SHAPE) float-like
    packed: output of pack_hubernet_params()
    Returns (B, OUTPUT_SHAPE) float32 action values.
    """
    obs = jnp.asarray(observation, jnp.float32)
    B, in_dim = obs.shape

    w1, w2, w3 = packed["w1"], packed["w2"], packed["w3"]
    b12, b3 = packed["b12"], packed["b3"]
    HP = w1.shape[1]
    OP = w3.shape[1]
    out_dim = b3.shape[1]

    # Batch tiling: big tiles amortize the ~0.35 us/step pipeline overhead.
    # TB is fitted to B so row padding stays tiny, and for large B we keep at
    # least 2 grid steps so v7x megacore gets work on both TensorCores.
    n_tiles = max(1, _cdiv(B, tb_max))
    if B >= 2048:
        n_tiles = max(n_tiles, 2)
    TB = _round_up(_cdiv(B, n_tiles), 8)
    B_pad = _round_up(B, TB)
    if B_pad != B:
        obs = jnp.pad(obs, ((0, B_pad - B), (0, 0)))

    grid = (B_pad // TB,)

    out = pl.pallas_call(
        _hubernet_mlp_kernel,
        out_shape=jax.ShapeDtypeStruct((B_pad, out_dim), jnp.float32),
        grid=grid,
        in_specs=[
            # Observation: tiled along the batch grid axis (f32 straight from HBM).
            pl.BlockSpec((TB, in_dim), lambda i: (i, 0)),
            # Weights / biases: constant index_map -> VMEM-resident across tiles.
            pl.BlockSpec((in_dim, HP), lambda i: (0, 0)),
            pl.BlockSpec((HP, HP), lambda i: (0, 0)),
            pl.BlockSpec((HP, OP), lambda i: (0, 0)),
            pl.BlockSpec((2, HP), lambda i: (0, 0)),
            pl.BlockSpec((1, out_dim), lambda i: (0, 0)),
        ],
        # Real-width output: last dim == full array dim, so no 32x padded
        # f32 writeback and no post-kernel column slice.
        out_specs=pl.BlockSpec((TB, out_dim), lambda i: (i, 0)),
        compiler_params=pltpu.CompilerParams(
            dimension_semantics=("parallel",),       # megacore shard on v7x
            vmem_limit_bytes=32 * 1024 * 1024,       # explicit, safe on all gens
        ),
    )(obs, w1, w2, w3, b12, b3)

    return out[:B] if B_pad != B else out


def init_hubernet_params(key, input_shape, output_shape, hidden=64):
    """Deterministic init mirroring nn.Linear default (uniform +/- 1/sqrt(fan_in)).

    Weights are stored transposed, i.e. (in_features, out_features).
    """
    def linear_init(k, fan_in, fan_out):
        kw, kb = jax.random.split(k)
        bound = 1.0 / jnp.sqrt(fan_in)
        w = jax.random.uniform(kw, (fan_in, fan_out), jnp.float32, -bound, bound)
        b = jax.random.uniform(kb, (fan_out,), jnp.float32, -bound, bound)
        return w, b

    k1, k2, k3 = jax.random.split(key, 3)
    w1, b1 = linear_init(k1, input_shape, hidden)
    w2, b2 = linear_init(k2, hidden, hidden)
    w3, b3 = linear_init(k3, hidden, output_shape)
    return {"w1": w1, "b1": b1, "w2": w2, "b2": b2, "w3": w3, "b3": b3}


def hubernet_reference_f32(observation, params):
    """Pure-f32 JAX reference (matches the PyTorch module numerics)."""
    x = jnp.asarray(observation, jnp.float32)
    h = jnp.maximum(x @ params["w1"] + params["b1"], 0.0)
    h = jnp.maximum(h @ params["w2"] + params["b2"], 0.0)
    return h @ params["w3"] + params["b3"]


def hubernet_reference_bf16(observation, params):
    """Reference with the same bf16-weight / f32-accumulate scheme as the kernel.

    NOTE: the kernel intentionally runs the MXU in bf16 (f32 accumulation);
    this is a documented precision tradeoff vs. the f32 PyTorch module.
    """
    x = jnp.asarray(observation, jnp.float32).astype(jnp.bfloat16)
    w1 = params["w1"].astype(jnp.bfloat16)
    w2 = params["w2"].astype(jnp.bfloat16)
    w3 = params["w3"].astype(jnp.bfloat16)
    h = jnp.dot(x, w1, preferred_element_type=jnp.float32) + params["b1"]
    h = jnp.maximum(h, 0.0).astype(jnp.bfloat16)
    h = jnp.dot(h, w2, preferred_element_type=jnp.float32) + params["b2"]
    h = jnp.maximum(h, 0.0).astype(jnp.bfloat16)
    return jnp.dot(h, w3, preferred_element_type=jnp.float32) + params["b3"]


if __name__ == "__main__":
    # Small shapes consistent with the module: a Q-network style MLP.
    BATCH = 8
    INPUT_SHAPE = 16   # observation dimension
    OUTPUT_SHAPE = 4   # number of actions

    key = jax.random.PRNGKey(0)
    k_obs, k_params, k_obs2, k_obs3 = jax.random.split(key, 4)

    params = init_hubernet_params(k_params, INPUT_SHAPE, OUTPUT_SHAPE)
    packed = jax.block_until_ready(pack_hubernet_params(params))  # one-time repack

    observation = jax.random.normal(k_obs, (BATCH, INPUT_SHAPE), jnp.float32)
    actions = jax.block_until_ready(hubernet_forward(observation, packed))
    assert actions.shape == (BATCH, OUTPUT_SHAPE)
    assert jnp.allclose(actions, hubernet_reference_bf16(observation, params),
                        atol=1e-3, rtol=1e-3)
    assert jnp.allclose(actions, hubernet_reference_f32(observation, params),
                        atol=3e-2, rtol=3e-2)

    # Non-multiple batch: single big tile, no column padding in the output.
    B2 = 600
    obs2 = jax.random.normal(k_obs2, (B2, INPUT_SHAPE), jnp.float32)
    actions2 = jax.block_until_ready(hubernet_forward(obs2, packed))
    assert actions2.shape == (B2, OUTPUT_SHAPE)
    assert jnp.allclose(actions2, hubernet_reference_bf16(obs2, params),
                        atol=1e-3, rtol=1e-3)

    # Large batch: exercises the >=2-step grid (v7x megacore) + row padding.
    B3 = 4100
    obs3 = jax.random.normal(k_obs3, (B3, INPUT_SHAPE), jnp.float32)
    actions3 = jax.block_until_ready(hubernet_forward(obs3, packed))
    assert actions3.shape == (B3, OUTPUT_SHAPE)
    assert jnp.allclose(actions3, hubernet_reference_bf16(obs3, params),
                        atol=1e-3, rtol=1e-3)

    print("KERNEL_OK")
</pallas_src>

<mosaic_0001>
module attributes {stable_mosaic.version = 11 : i64} {
  func.func @_hubernet_mlp_kernel(%arg0: i32, %arg1: memref<8x16xf32, #tpu.memory_space<vmem>>, %arg2: memref<16x128xbf16, #tpu.memory_space<vmem>>, %arg3: memref<128x128xbf16, #tpu.memory_space<vmem>>, %arg4: memref<128x128xbf16, #tpu.memory_space<vmem>>, %arg5: memref<2x128xf32, #tpu.memory_space<vmem>>, %arg6: memref<1x4xf32, #tpu.memory_space<vmem>>, %arg7: memref<8x4xf32, #tpu.memory_space<vmem>>) attributes {dimension_semantics = [#tpu.dimension_semantics<parallel>], iteration_bounds = array<i64: 1>, scalar_prefetch = 0 : i64, scratch_operands = 0 : i64, tpu.core_type = #tpu.core_type<tc>, window_params = [{transform_indices = @transform_0, window_bounds = array<i64: 8, 16>}, {pipeline_mode = #tpu.pipeline_mode<synchronous>, transform_indices = @transform_1, window_bounds = array<i64: 16, 128>}, {pipeline_mode = #tpu.pipeline_mode<synchronous>, transform_indices = @transform_2, window_bounds = array<i64: 128, 128>}, {pipeline_mode = #tpu.pipeline_mode<synchronous>, transform_indices = @transform_3, window_bounds = array<i64: 128, 128>}, {pipeline_mode = #tpu.pipeline_mode<synchronous>, transform_indices = @transform_4, window_bounds = array<i64: 2, 128>}, {pipeline_mode = #tpu.pipeline_mode<synchronous>, transform_indices = @transform_5, window_bounds = array<i64: 1, 4>}, {transform_indices = @transform_6, window_bounds = array<i64: 8, 4>}]} {
    %c0 = arith.constant 0 : index
    %c0_0 = arith.constant 0 : index
    %0 = vector.load %arg1[%c0, %c0_0] : memref<8x16xf32, #tpu.memory_space<vmem>>, vector<8x16xf32>
    %1 = arith.truncf %0 : vector<8x16xf32> to vector<8x16xbf16>
    %c0_1 = arith.constant 0 : index
    %c0_2 = arith.constant 0 : index
    %2 = vector.load %arg2[%c0_1, %c0_2] : memref<16x128xbf16, #tpu.memory_space<vmem>>, vector<16x128xbf16>
    %cst = arith.constant dense<0.000000e+00> : vector<8x128xf32>
    %3 = tpu.matmul %1, %2, %cst {dimension_numbers = #tpu.dot_dimension_numbers<[1], [0], [0], [1], [0, 0, 1, 1], [], []>} : vector<8x16xbf16>, vector<16x128xbf16>, vector<8x128xf32> -> vector<8x128xf32>
    %c0_3 = arith.constant 0 : index
    %c0_4 = arith.constant 0 : index
    %4 = vector.load %arg5[%c0_3, %c0_4] : memref<2x128xf32, #tpu.memory_space<vmem>>, vector<1x128xf32>
    %5 = vector.broadcast %4 : vector<1x128xf32> to vector<8x128xf32>
    %6 = arith.addf %3, %5 : vector<8x128xf32>
    %cst_5 = arith.constant 0.000000e+00 : f32
    %7 = vector.broadcast %cst_5 : f32 to vector<8x128xf32>
    %8 = arith.maximumf %6, %7 : vector<8x128xf32>
    %9 = arith.truncf %8 : vector<8x128xf32> to vector<8x128xbf16>
    %c0_6 = arith.constant 0 : index
    %c0_7 = arith.constant 0 : index
    %10 = vector.load %arg3[%c0_6, %c0_7] : memref<128x128xbf16, #tpu.memory_space<vmem>>, vector<128x128xbf16>
    %cst_8 = arith.constant dense<0.000000e+00> : vector<8x128xf32>
    %11 = tpu.matmul %9, %10, %cst_8 {dimension_numbers = #tpu.dot_dimension_numbers<[1], [0], [0], [1], [0, 0, 1, 1], [], []>} : vector<8x128xbf16>, vector<128x128xbf16>, vector<8x128xf32> -> vector<8x128xf32>
    %c1 = arith.constant 1 : index
    %c0_9 = arith.constant 0 : index
    %12 = vector.load %arg5[%c1, %c0_9] : memref<2x128xf32, #tpu.memory_space<vmem>>, vector<1x128xf32>
    %13 = vector.broadcast %12 : vector<1x128xf32> to vector<8x128xf32>
    %14 = arith.addf %11, %13 : vector<8x128xf32>
    %cst_10 = arith.constant 0.000000e+00 : f32
    %15 = vector.broadcast %cst_10 : f32 to vector<8x128xf32>
    %16 = arith.maximumf %14, %15 : vector<8x128xf32>
    %17 = arith.truncf %16 : vector<8x128xf32> to vector<8x128xbf16>
    %c0_11 = arith.constant 0 : index
    %c0_12 = arith.constant 0 : index
    %18 = vector.load %arg4[%c0_11, %c0_12] : memref<128x128xbf16, #tpu.memory_space<vmem>>, vector<128x128xbf16>
    %cst_13 = arith.constant dense<0.000000e+00> : vector<8x128xf32>
    %19 = tpu.matmul %17, %18, %cst_13 {dimension_numbers = #tpu.dot_dimension_numbers<[1], [0], [0], [1], [0, 0, 1, 1], [], []>} : vector<8x128xbf16>, vector<128x128xbf16>, vector<8x128xf32> -> vector<8x128xf32>
    %20 = vector.extract_strided_slice %19 {offsets = [0, 0], sizes = [8, 4], strides = [1, 1]} : vector<8x128xf32> to vector<8x4xf32>
    %c0_14 = arith.constant 0 : index
    %c0_15 = arith.constant 0 : index
    %21 = vector.load %arg6[%c0_14, %c0_15] : memref<1x4xf32, #tpu.memory_space<vmem>>, vector<1x4xf32>
    %22 = vector.broadcast %21 : vector<1x4xf32> to vector<8x4xf32>
    %23 = arith.addf %20, %22 : vector<8x4xf32>
    %c0_16 = arith.constant 0 : index
    %c0_17 = arith.constant 0 : index
    %24 = vector.load %arg7[%c0_16, %c0_17] : memref<8x4xf32, #tpu.memory_space<vmem>>, vector<8x4xf32>
    tpu.vector_store %arg7[%c0_16, %c0_17], %23 {strides = array<i32>} : memref<8x4xf32, #tpu.memory_space<vmem>>, vector<8x4xf32>,
    return
  }
  func.func @transform_0(%arg0: i32) -> (i32, i32) {
    %c0_i32 = arith.constant 0 : i32
    %c0_i32_0 = arith.constant 0 : i32
    return %arg0, %c0_i32 : i32, i32
  }
  func.func @transform_1(%arg0: i32) -> (i32, i32) {
    %c0_i32 = arith.constant 0 : i32
    %c0_i32_0 = arith.constant 0 : i32
    %c0_i32_1 = arith.constant 0 : i32
    return %c0_i32, %c0_i32_0 : i32, i32
  }
  func.func @transform_2(%arg0: i32) -> (i32, i32) {
    %c0_i32 = arith.constant 0 : i32
    %c0_i32_0 = arith.constant 0 : i32
    %c0_i32_1 = arith.constant 0 : i32
    return %c0_i32, %c0_i32_0 : i32, i32
  }
  func.func @transform_3(%arg0: i32) -> (i32, i32) {
    %c0_i32 = arith.constant 0 : i32
    %c0_i32_0 = arith.constant 0 : i32
    %c0_i32_1 = arith.constant 0 : i32
    return %c0_i32, %c0_i32_0 : i32, i32
  }
  func.func @transform_4(%arg0: i32) -> (i32, i32) {
    %c0_i32 = arith.constant 0 : i32
    %c0_i32_0 = arith.constant 0 : i32
    %c0_i32_1 = arith.constant 0 : i32
    return %c0_i32, %c0_i32_0 : i32, i32
  }
  func.func @transform_5(%arg0: i32) -> (i32, i32) {
    %c0_i32 = arith.constant 0 : i32
    %c0_i32_0 = arith.constant 0 : i32
    %c0_i32_1 = arith.constant 0 : i32
    return %c0_i32, %c0_i32_0 : i32, i32
  }
  func.func @transform_6(%arg0: i32) -> (i32, i32) {
    %c0_i32 = arith.constant 0 : i32
    %c0_i32_0 = arith.constant 0 : i32
    return %arg0, %c0_i32 : i32, i32
  }
}

</mosaic_0001>

<llo_original>
// kernel: hubernet_forward.1
$region0: #{hubernet_forward.1}
  #allocation0 [shape = 'u32[]', space=smem, size = 0x4, offset = 0x4, fixed_abs, tag = 'smem constant byte address 0x4 - core index']
  #allocation1 [shape = 'u32[144,128]{1,0:T(1,128)}', space=vmem, size = 0x12000, scoped, tag = 'internal scratch']
  %s0 = inlined_call_operand.hbm [shape: f32[8,16], index: 0, kind: input, shape index: {}]
  %s1 = inlined_call_operand.hbm [shape: bf16[16,128], index: 1, kind: input, shape index: {}]
  %s2 = inlined_call_operand.hbm [shape: bf16[128,128], index: 2, kind: input, shape index: {}]
  %s3 = inlined_call_operand.hbm [shape: bf16[128,128], index: 3, kind: input, shape index: {}]
  %s4 = inlined_call_operand.hbm [shape: f32[2,128], index: 4, kind: input, shape index: {}]
  %s5 = inlined_call_operand.vmem [shape: f32[1,4], index: 5, kind: input, shape index: {}]
  %s6 = inlined_call_operand.vmem [shape: f32[8,4], index: 6, kind: output, shape index: {}]
  %s7 = sld [smem:[#allocation0]]
  $region54: #{hubernet_forward.1} parent=0
    _
  %s9 = ssub.s32 1, %s7
  %s10 = scalar_select 0, %s9, %s7
  $region1: #{hubernet_forward.1} parent=0
    #allocation2 [shape = 'u8[4096]{0}', space=vmem, size = 0x1000, scoped, tag = 'input window, operand 0, single buffered']
    #allocation3 [shape = 's32[1]{0}', space=sflag, size = 0x4, scoped, tag = 'scoped memory for hubernet_forward.1']
    #allocation4 [shape = 'u8[4096]{0}', space=vmem, size = 0x1000, scoped, tag = 'input window, operand 1, single buffered']
    #allocation5 [shape = 's32[1]{0}', space=sflag, size = 0x4, scoped, tag = 'scoped memory for hubernet_forward.1']
    #allocation6 [shape = 'u8[32768]{0}', space=vmem, size = 0x8000, scoped, tag = 'input window, operand 2, single buffered']
    #allocation7 [shape = 'u8[32768]{0}', space=vmem, size = 0x8000, scoped, tag = 'input window, operand 3, single buffered']
    #allocation8 [shape = 's32[1]{0}', space=sflag, size = 0x4, scoped, tag = 'scoped memory for hubernet_forward.1']
    #allocation9 [shape = 'u8[1024]{0}', space=vmem, size = 0x400, scoped, tag = 'input window, operand 4, single buffered']
    %11 = vsyncpa [#allocation3], 0
    %12 = vsyncpa [#allocation5], 0
    %13 = vsyncpa [#allocation8], 0
    // Predicated region
    $region2: #{hubernet_forward.1} parent=1 // pred_check
      _
    $region3: #{hubernet_forward.1} parent=1 // pred_check_branch
      %15 = sbr.rel (0) target = $region5
    $region4: #{hubernet_forward.1} parent=1 // pred_region
      %s17 = ssub.s32 128, 128
      %18 = vsyncadd [#allocation3], %s17
      %s20 = sshll.u32 [#allocation2], 4
      %s21 = int_to_ptr.vmem [resolvable:$true] %s20
      %23 = dma.hbm_to_vmem [thread:$0]  %s0, 128, %s21, [#allocation3]
    $region5: #{hubernet_forward.1} parent=1 // pred_fallthru
      _
    // Predicated region
    $region6: #{hubernet_forward.1} parent=1 // pred_check
      _
    $region7: #{hubernet_forward.1} parent=1 // pred_check_branch
      %25 = sbr.rel (0) target = $region9
    $region8: #{hubernet_forward.1} parent=1 // pred_region
      %s27 = ssub.s32 128, 128
      %28 = vsyncadd [#allocation5], %s27
      %s29 = sshll.u32 [#allocation4], 4
      %s30 = int_to_ptr.vmem [resolvable:$true] %s29
      %35 = dma.hbm_to_vmem [thread:$0]  %s1, 128, %s30, [#allocation5], 64, 64, 4
    $region9: #{hubernet_forward.1} parent=1 // pred_fallthru
      _
    // Predicated region
    $region10: #{hubernet_forward.1} parent=1 // pred_check
      _
    $region11: #{hubernet_forward.1} parent=1 // pred_check_branch
      %37 = sbr.rel (0) target = $region13
    $region12: #{hubernet_forward.1} parent=1 // pred_region
      %s39 = ssub.s32 1024, 1024
      %40 = vsyncadd [#allocation5], %s39
      %s41 = sshll.u32 [#allocation6], 4
      %s42 = int_to_ptr.vmem [resolvable:$true] %s41
      %47 = dma.hbm_to_vmem [thread:$0]  %s2, 1024, %s42, [#allocation5], 64, 64, 4
    $region13: #{hubernet_forward.1} parent=1 // pred_fallthru
      _
    // Predicated region
    $region14: #{hubernet_forward.1} parent=1 // pred_check
      _
    $region15: #{hubernet_forward.1} parent=1 // pred_check_branch
      %49 = sbr.rel (0) target = $region17
    $region16: #{hubernet_forward.1} parent=1 // pred_region
      %s51 = ssub.s32 1024, 1024
      %52 = vsyncadd [#allocation8], %s51
      %s53 = sshll.u32 [#allocation7], 4
      %s54 = int_to_ptr.vmem [resolvable:$true] %s53
      %59 = dma.hbm_to_vmem [thread:$0]  %s3, 1024, %s54, [#allocation8], 64, 64, 4
    $region17: #{hubernet_forward.1} parent=1 // pred_fallthru
      _
    // Predicated region
    $region18: #{hubernet_forward.1} parent=1 // pred_check
      _
    $region19: #{hubernet_forward.1} parent=1 // pred_check_branch
      %61 = sbr.rel (0) target = $region21
    $region20: #{hubernet_forward.1} parent=1 // pred_region
      %s63 = ssub.s32 32, 32
      %64 = vsyncadd [#allocation8], %s63
      %s66 = sshll.u32 [#allocation9], 4
      %s67 = int_to_ptr.vmem [resolvable:$true] %s66
      %69 = dma.hbm_to_vmem [thread:$0]  %s4, 32, %s67, [#allocation8]
    $region21: #{hubernet_forward.1} parent=1 // pred_fallthru
      _
    // Predicated region
    $region22: #{hubernet_forward.1} parent=1 // pred_check
      _
    $region23: #{hubernet_forward.1} parent=1 // pred_check_branch
      %71 = sbr.rel (0) target = $region25
    $region24: #{hubernet_forward.1} parent=1 // pred_region
      _
    $region25: #{hubernet_forward.1} parent=1 // pred_fallthru
      _
    // Predicated region
    $region26: #{hubernet_forward.1} parent=1 // pred_check
      _
    $region27: #{hubernet_forward.1} parent=1 // pred_check_branch
      %73 = sbr.rel (0) target = $region29
    $region28: #{hubernet_forward.1} parent=1 // pred_region
      %74 = dma.done [#allocation3], 128
    $region29: #{hubernet_forward.1} parent=1 // pred_fallthru
      _
    // Predicated region
    $region30: #{hubernet_forward.1} parent=1 // pred_check
      _
    $region31: #{hubernet_forward.1} parent=1 // pred_check_branch
      %76 = sbr.rel (0) target = $region33
    $region32: #{hubernet_forward.1} parent=1 // pred_region
      %77 = dma.done [#allocation5], 128
    $region33: #{hubernet_forward.1} parent=1 // pred_fallthru
      _
    // Predicated region
    $region34: #{hubernet_forward.1} parent=1 // pred_check
      _
    $region35: #{hubernet_forward.1} parent=1 // pred_check_branch
      %79 = sbr.rel (0) target = $region37
    $region36: #{hubernet_forward.1} parent=1 // pred_region
      %80 = dma.done [#allocation5], 1024
    $region37: #{hubernet_forward.1} parent=1 // pred_fallthru
      _
    // Predicated region
    $region38: #{hubernet_forward.1} parent=1 // pred_check
      _
    $region39: #{hubernet_forward.1} parent=1 // pred_check_branch
      %82 = sbr.rel (0) target = $region41
    $region40: #{hubernet_forward.1} parent=1 // pred_region
      %83 = dma.done [#allocation8], 1024
    $region41: #{hubernet_forward.1} parent=1 // pred_fallthru
      _
    // Predicated region
    $region42: #{hubernet_forward.1} parent=1 // pred_check
      _
    $region43: #{hubernet_forward.1} parent=1 // pred_check_branch
      %85 = sbr.rel (0) target = $region45
    $region44: #{hubernet_forward.1} parent=1 // pred_region
      %86 = dma.done [#allocation8], 32
    $region45: #{hubernet_forward.1} parent=1 // pred_fallthru
      _
    %v88 = vld [vmem:[#allocation2] sm:$0xff]
    %v89 = vpack.c.bf16 %v88, %v88
    %v90 = vld [vmem:[#allocation4] sm:$0xf]
    %v91 = vld [vmem:[#allocation4 + $0x4] sm:$0xf]
    %v92 = vld [vmem:[#allocation9] sm:$0x1]
    %v93 = vlaneseq
    %v94 = vshrl.u32 %v93, 7
    %v95 = vsub.s32 0, %v94
    %v96 = vrot.slane %v92, %v95
    %v99 = vunpack.c.l.b16 %v90
    %v100 = vunpack.c.l.b16 %v91
    %v101 = vpack.c.b16 %v100, %v99
    %vm103 = vcmask 130048
    %v105 = vsel %vm103, %v89, 0
    %107 = vmatprep.subr.bf16.mxu0 0
    %108 = vmatpush1.bf16.msra.mxu0 0
    %109 = vmatprep.subr.bf16.mxu0 0
    %110 = vmatpush1.bf16.msra.mxu0 0
    %111 = vmatprep.subr.bf16.mxu0 0
    %112 = vmatpush1.bf16.msra.mxu0 0
    %113 = vmatprep.subr.bf16.mxu0 0
    %114 = vmatpush1.bf16.msra.mxu0 0
    %115 = vmatprep.subr.bf16.mxu0 0
    %116 = vmatpush1.bf16.msra.mxu0 0
    %117 = vmatprep.subr.bf16.mxu0 0
    %118 = vmatpush1.bf16.msra.mxu0 0
    %119 = vmatprep.subr.bf16.mxu0 0
    %120 = vmatpush1.bf16.msra.mxu0 0
    %121 = vmatprep.subr.bf16.mxu0 0
    %122 = vmatpush1.bf16.msra.mxu0 %v101
    %123 = vmatprep.subr.bf16.mxu0 0
    %124 = vmatpush2.bf16.msra.mxu0 0
    %125 = vmatprep.subr.bf16.mxu0 0
    %126 = vmatpush2.bf16.msra.mxu0 0
    %127 = vmatprep.subr.bf16.mxu0 0
    %128 = vmatpush2.bf16.msra.mxu0 0
    %129 = vmatprep.subr.bf16.mxu0 0
    %130 = vmatpush2.bf16.msra.mxu0 0
    %131 = vmatprep.subr.bf16.mxu0 0
    %132 = vmatpush2.bf16.msra.mxu0 0
    %133 = vmatprep.subr.bf16.mxu0 0
    %134 = vmatpush2.bf16.msra.mxu0 0
    %135 = vmatprep.subr.bf16.mxu0 0
    %136 = vmatpush2.bf16.msra.mxu0 0
    %137 = vmatprep.subr.bf16.mxu0 0
    %138 = vmatpush2.bf16.msra.mxu0 0
    %139 = vmatprep.mubr.bf16.mxu0 0
    %140 = vmatmul.mubr.bf16.gmra.mxu0 %v105
    %v141 = vpop.f32.mrf.mxu0
    %v142 = vadd.f32 %v96, %v141
    %v143 = vpop.f32.mrf.mxu0
    %v144 = vpop.f32.mrf.mxu0
    %v145 = vpop.f32.mrf.mxu0
    %146 = vdwg.mxu0
    %v147 = vmax.f32 %v142, 0.0
    %v148 = vpack.c.bf16 %v147, %v147
    %v149 = vld [vmem:[#allocation6] sm:$0xf]
    %v150 = vld [vmem:[#allocation6 + $0x4] sm:$0xf]
    %v151 = vld [vmem:[#allocation6 + $0x8] sm:$0xf]
    %v152 = vld [vmem:[#allocation6 + $0xc] sm:$0xf]
    %v153 = vld [vmem:[#allocation6 + $0x10] sm:$0xf]
    %v154 = vld [vmem:[#allocation6 + $0x14] sm:$0xf]
    %v155 = vld [vmem:[#allocation6 + $0x18] sm:$0xf]
    %v156 = vld [vmem:[#allocation6 + $0x1c] sm:$0xf]
    %v157 = vld [vmem:[#allocation6 + $0x20] sm:$0xf]
    %v158 = vld [vmem:[#allocation6 + $0x24] sm:$0xf]
    %v159 = vld [vmem:[#allocation6 + $0x28] sm:$0xf]
    %v160 = vld [vmem:[#allocation6 + $0x2c] sm:$0xf]
    %v161 = vld [vmem:[#allocation6 + $0x30] sm:$0xf]
    %v162 = vld [vmem:[#allocation6 + $0x34] sm:$0xf]
    %v163 = vld [vmem:[#allocation6 + $0x38] sm:$0xf]
    %v164 = vld [vmem:[#allocation6 + $0x3c] sm:$0xf]
    %v165 = vld [vmem:[#allocation9 + $0x1] sm:$0x1]
    %v166 = vlaneseq
    %v167 = vshrl.u32 %v166, 7
    %v168 = vsub.s32 0, %v167
    %v169 = vrot.slane %v165, %v168
    %v186 = vunpack.c.l.b16 %v149
    %v187 = vunpack.c.l.b16 %v150
    %v188 = vunpack.c.l.b16 %v151
    %v189 = vunpack.c.l.b16 %v152
    %v190 = vunpack.c.l.b16 %v153
    %v191 = vunpack.c.l.b16 %v154
    %v192 = vunpack.c.l.b16 %v155
    %v193 = vunpack.c.l.b16 %v156
    %v194 = vunpack.c.l.b16 %v157
    %v195 = vunpack.c.l.b16 %v158
    %v196 = vunpack.c.l.b16 %v159
    %v197 = vunpack.c.l.b16 %v160
    %v198 = vunpack.c.l.b16 %v161
    %v199 = vunpack.c.l.b16 %v162
    %v200 = vunpack.c.l.b16 %v163
    %v201 = vunpack.c.l.b16 %v164
    %v202 = vpack.c.b16 %v187, %v186
    %v203 = vpack.c.b16 %v189, %v188
    %v204 = vpack.c.b16 %v191, %v190
    %v205 = vpack.c.b16 %v193, %v192
    %v206 = vpack.c.b16 %v195, %v194
    %v207 = vpack.c.b16 %v197, %v196
    %v208 = vpack.c.b16 %v199, %v198
    %v209 = vpack.c.b16 %v201, %v200
    %218 = vmatprep.subr.bf16.mxu0 0
    %219 = vmatpush1.bf16.msra.mxu0 %v209
    %220 = vmatprep.subr.bf16.mxu0 0
    %221 = vmatpush1.bf16.msra.mxu0 %v208
    %222 = vmatprep.subr.bf16.mxu0 0
    %223 = vmatpush1.bf16.msra.mxu0 %v207
    %224 = vmatprep.subr.bf16.mxu0 0
    %225 = vmatpush1.bf16.msra.mxu0 %v206
    %226 = vmatprep.subr.bf16.mxu0 0
    %227 = vmatpush1.bf16.msra.mxu0 %v205
    %228 = vmatprep.subr.bf16.mxu0 0
    %229 = vmatpush1.bf16.msra.mxu0 %v204
    %230 = vmatprep.subr.bf16.mxu0 0
    %231 = vmatpush1.bf16.msra.mxu0 %v203
    %232 = vmatprep.subr.bf16.mxu0 0
    %233 = vmatpush1.bf16.msra.mxu0 %v202
    %234 = vmatprep.subr.bf16.mxu0 0
    %235 = vmatpush2.bf16.msra.mxu0 0
    %236 = vmatprep.subr.bf16.mxu0 0
    %237 = vmatpush2.bf16.msra.mxu0 0
    %238 = vmatprep.subr.bf16.mxu0 0
    %239 = vmatpush2.bf16.msra.mxu0 0
    %240 = vmatprep.subr.bf16.mxu0 0
    %241 = vmatpush2.bf16.msra.mxu0 0
    %242 = vmatprep.subr.bf16.mxu0 0
    %243 = vmatpush2.bf16.msra.mxu0 0
    %244 = vmatprep.subr.bf16.mxu0 0
    %245 = vmatpush2.bf16.msra.mxu0 0
    %246 = vmatprep.subr.bf16.mxu0 0
    %247 = vmatpush2.bf16.msra.mxu0 0
    %248 = vmatprep.subr.bf16.mxu0 0
    %249 = vmatpush2.bf16.msra.mxu0 0
    %250 = vmatprep.mubr.bf16.mxu0 0
    %251 = vmatmul.mubr.bf16.gmra.mxu0 %v148
    %v252 = vpop.f32.mrf.mxu0
    %v253 = vadd.f32 %v169, %v252
    %v254 = vpop.f32.mrf.mxu0
    %v255 = vpop.f32.mrf.mxu0
    %v256 = vpop.f32.mrf.mxu0
    %257 = vdwg.mxu0
    %v258 = vmax.f32 %v253, 0.0
    %v259 = vpack.c.bf16 %v258, %v258
    %v260 = vld [vmem:[#allocation7] sm:$0xf]
    %v261 = vld [vmem:[#allocation7 + $0x4] sm:$0xf]
    %v262 = vld [vmem:[#allocation7 + $0x8] sm:$0xf]
    %v263 = vld [vmem:[#allocation7 + $0xc] sm:$0xf]
    %v264 = vld [vmem:[#allocation7 + $0x10] sm:$0xf]
    %v265 = vld [vmem:[#allocation7 + $0x14] sm:$0xf]
    %v266 = vld [vmem:[#allocation7 + $0x18] sm:$0xf]
    %v267 = vld [vmem:[#allocation7 + $0x1c] sm:$0xf]
    %v268 = vld [vmem:[#allocation7 + $0x20] sm:$0xf]
    %v269 = vld [vmem:[#allocation7 + $0x24] sm:$0xf]
    %v270 = vld [vmem:[#allocation7 + $0x28] sm:$0xf]
    %v271 = vld [vmem:[#allocation7 + $0x2c] sm:$0xf]
    %v272 = vld [vmem:[#allocation7 + $0x30] sm:$0xf]
    %v273 = vld [vmem:[#allocation7 + $0x34] sm:$0xf]
    %v274 = vld [vmem:[#allocation7 + $0x38] sm:$0xf]
    %v275 = vld [vmem:[#allocation7 + $0x3c] sm:$0xf]
    %v292 = vunpack.c.l.b16 %v260
    %v293 = vunpack.c.l.b16 %v261
    %v294 = vunpack.c.l.b16 %v262
    %v295 = vunpack.c.l.b16 %v263
    %v296 = vunpack.c.l.b16 %v264
    %v297 = vunpack.c.l.b16 %v265
    %v298 = vunpack.c.l.b16 %v266
    %v299 = vunpack.c.l.b16 %v267
    %v300 = vunpack.c.l.b16 %v268
    %v301 = vunpack.c.l.b16 %v269
    %v302 = vunpack.c.l.b16 %v270
    %v303 = vunpack.c.l.b16 %v271
    %v304 = vunpack.c.l.b16 %v272
    %v305 = vunpack.c.l.b16 %v273
    %v306 = vunpack.c.l.b16 %v274
    %v307 = vunpack.c.l.b16 %v275
    %v308 = vpack.c.b16 %v293, %v292
    %v309 = vpack.c.b16 %v295, %v294
    %v310 = vpack.c.b16 %v297, %v296
    %v311 = vpack.c.b16 %v299, %v298
    %v312 = vpack.c.b16 %v301, %v300
    %v313 = vpack.c.b16 %v303, %v302
    %v314 = vpack.c.b16 %v305, %v304
    %v315 = vpack.c.b16 %v307, %v306
    %324 = vmatprep.subr.bf16.mxu0 0
    %325 = vmatpush1.bf16.msra.mxu0 %v315
    %326 = vmatprep.subr.bf16.mxu0 0
    %327 = vmatpush1.bf16.msra.mxu0 %v314
    %328 = vmatprep.subr.bf16.mxu0 0
    %329 = vmatpush1.bf16.msra.mxu0 %v313
    %330 = vmatprep.subr.bf16.mxu0 0
    %331 = vmatpush1.bf16.msra.mxu0 %v312
    %332 = vmatprep.subr.bf16.mxu0 0
    %333 = vmatpush1.bf16.msra.mxu0 %v311
    %334 = vmatprep.subr.bf16.mxu0 0
    %335 = vmatpush1.bf16.msra.mxu0 %v310
    %336 = vmatprep.subr.bf16.mxu0 0
    %337 = vmatpush1.bf16.msra.mxu0 %v309
    %338 = vmatprep.subr.bf16.mxu0 0
    %339 = vmatpush1.bf16.msra.mxu0 %v308
    %340 = vmatprep.subr.bf16.mxu0 0
    %341 = vmatpush2.bf16.msra.mxu0 0
    %342 = vmatprep.subr.bf16.mxu0 0
    %343 = vmatpush2.bf16.msra.mxu0 0
    %344 = vmatprep.subr.bf16.mxu0 0
    %345 = vmatpush2.bf16.msra.mxu0 0
    %346 = vmatprep.subr.bf16.mxu0 0
    %347 = vmatpush2.bf16.msra.mxu0 0
    %348 = vmatprep.subr.bf16.mxu0 0
    %349 = vmatpush2.bf16.msra.mxu0 0
    %350 = vmatprep.subr.bf16.mxu0 0
    %351 = vmatpush2.bf16.msra.mxu0 0
    %352 = vmatprep.subr.bf16.mxu0 0
    %353 = vmatpush2.bf16.msra.mxu0 0
    %354 = vmatprep.subr.bf16.mxu0 0
    %355 = vmatpush2.bf16.msra.mxu0 0
    %356 = vmatprep.mubr.bf16.mxu0 0
    %357 = vmatmul.mubr.bf16.gmra.mxu0 %v259
    %v358 = vpop.f32.mrf.mxu0
    %v359 = vadd.f32 0.0, %v358
    %v360 = vpop.f32.mrf.mxu0
    %v361 = vpop.f32.mrf.mxu0
    %v362 = vpop.f32.mrf.mxu0
    %363 = vdwg.mxu0
    %v364 = vld [vmem:[%s5] sm:$0x1]
    %v366 = vlaneseq
    %v367 = vshrl.u32 %v366, 7
    %v368 = vsub.s32 0, %v367
    %v369 = vrot.slane %v364, %v368
    %v371 = vadd.f32 %v359, %v369
    %vm372 = vcmask 31744
    %373 = vst.msk [vmem:[%s6] sm:$0xff] %vm372, %v371
    // Predicated region
    $region46: #{hubernet_forward.1} parent=1 // pred_check
      _
    $region47: #{hubernet_forward.1} parent=1 // pred_check_branch
      %375 = sbr.rel (0) target = $region49
    $region48: #{hubernet_forward.1} parent=1 // pred_region
      _
    $region49: #{hubernet_forward.1} parent=1 // pred_fallthru
      _
    // Predicated region
    $region50: #{hubernet_forward.1} parent=1 // pred_check
      _
    $region51: #{hubernet_forward.1} parent=1 // pred_check_branch
      %377 = sbr.rel (0) target = $region53
    $region52: #{hubernet_forward.1} parent=1 // pred_region
      _
    $region53: #{hubernet_forward.1} parent=1 // pred_fallthru
      _
    %378 = vsyncpa [#allocation3], 1
    %379 = vsyncpa [#allocation5], 1
    %380 = vsyncpa [#allocation8], 1

</llo_original>
